<compile_context>
chip_gen: v7x
topology: tpu7x:2x2x1
jax: 0.10.0
libtpu: 0.0.40
codegen_flags: <defaults>
</compile_context>

<pallas_src>
import functools
import math

import jax
import jax.numpy as jnp
from jax.experimental import pallas as pl
from jax.experimental.pallas import tpu as pltpu


def _vmem_plan():
    """(tile_budget_bytes, vmem_limit_bytes), derived from the chip's VMEM."""
    try:
        cap = int(pltpu.get_tpu_info().vmem_capacity_bytes)
    except Exception:  # pragma: no cover - conservative fallback (v7x-sized)
        cap = 64 * 1024 * 1024
    # 96 MiB limit on 128-MiB chips (v5e/v6e), 48 MiB on v7x's 64 MiB.
    vmem_limit = min(100 * 1024 * 1024, (cap * 3) // 4)
    tile_budget = (vmem_limit * 3) // 4          # headroom for compiler scratch
    return tile_budget, vmem_limit


def _pick_tile_rows(n, c, stream_itemsizes, f32_live, budget, n_buffers):
    """Largest sublane-aligned row-tile whose working set fits the budget."""
    per_row = sum(n_buffers * isz * c for isz in stream_itemsizes) + f32_live * 4 * c
    tn = budget // max(per_row, 1)
    if tn >= n:
        return n                          # whole batch in a single block
    return max(16, (tn // 16) * 16)       # sublane-aligned for f32 and bf16


def _accumulate_rows(out_ref, row_kl, row0, tile_rows, n_total):
    """Add sum(row_kl over valid rows) into the resident per-core out block.

    Full tiles skip the row-mask math entirely; the last real tile and any
    clamped/duplicated overflow tiles mask rows past the true batch size.
    Padded rows may have gone through exp on stale VMEM (inf/NaN), but the
    mask is a select, so the discarded branch never propagates.
    """
    is_full = row0 + tile_rows <= n_total

    @pl.when(is_full)
    def _():
        out_ref[...] += jnp.sum(row_kl)

    @pl.when(jnp.logical_not(is_full))
    def _():
        rows = jax.lax.broadcasted_iota(jnp.int32, row_kl.shape, 0) + row0
        out_ref[...] += jnp.sum(jnp.where(rows < n_total, row_kl, 0.0))


def _kl_float_kernel(x_ref, t_ref, out_ref, *, tile_rows, n_total, blocks_per_core):
    s = pl.program_id(1)
    blk = pl.program_id(0) * blocks_per_core + s      # global row-block index
    row0 = blk * tile_rows

    @pl.when(s == 0)
    def _init():
        out_ref[...] = jnp.zeros_like(out_ref)

    x = x_ref[...].astype(jnp.float32)                # (TN, C) output logits
    t = t_ref[...].astype(jnp.float32)                # (TN, C) target logits

    xs = x - jnp.max(x, axis=1, keepdims=True)
    ts = t - jnp.max(t, axis=1, keepdims=True)
    sx = jnp.sum(jnp.exp(xs), axis=1, keepdims=True)  # (TN, 1)
    te = jnp.exp(ts)
    z = jnp.sum(te, axis=1, keepdims=True)            # (TN, 1)

    # log q - log p fused in log space; only per-row logs, no (TN, C)
    # log_p / log_q intermediates.
    diff = (ts - xs) + (jnp.log(sx) - jnp.log(z))
    # Guard: q == 0 exactly iff the target logit is -inf; 0 * log 0 must be 0
    # (matches torch.xlogy in F.kl_div). One cmp+select/elem, free at roofline.
    w = jnp.where(te > 0.0, te * diff, 0.0)
    row_kl = jnp.sum(w, axis=1, keepdims=True) / z    # exact (TN,1)-only divide

    _accumulate_rows(out_ref, row_kl, row0, tile_rows, n_total)


def _kl_int_kernel(x_ref, ids_ref, out_ref, *, tile_rows, n_total, blocks_per_core,
                   q_hot, q_oth, neg_entropy, num_classes):
    # Closed-form targets: q = softmax(one_hot(id)) has q_hot = e/(e+C-1) at the
    # labelled class and q_oth = 1/(e+C-1) elsewhere, so
    #   KL(row) = H_const - (q_hot - q_oth)*log_p[id] - q_oth * sum_j log_p[j]
    # and the (N, C) targets stream disappears entirely.
    s = pl.program_id(1)
    blk = pl.program_id(0) * blocks_per_core + s
    row0 = blk * tile_rows

    @pl.when(s == 0)
    def _init():
        out_ref[...] = jnp.zeros_like(out_ref)

    x = x_ref[...].astype(jnp.float32)                # (TN, C)
    ids = ids_ref[...]                                # (TN, 1) int32

    xs = x - jnp.max(x, axis=1, keepdims=True)
    log_sx = jnp.log(jnp.sum(jnp.exp(xs), axis=1, keepdims=True))   # (TN, 1)
    sum_xs = jnp.sum(xs, axis=1, keepdims=True)                     # (TN, 1)
    lane = jax.lax.broadcasted_iota(jnp.int32, x.shape, 1)
    xs_hot = jnp.sum(jnp.where(lane == ids, xs, 0.0), axis=1, keepdims=True)

    lp_hot = xs_hot - log_sx                          # log_p at the hot class
    sum_lp = sum_xs - num_classes * log_sx            # sum_j log_p[j]
    row_kl = neg_entropy - (q_hot - q_oth) * lp_hot - q_oth * sum_lp

    _accumulate_rows(out_ref, row_kl, row0, tile_rows, n_total)


def kl_divergence_loss(outputs, targets, *, tile_rows=None):
    """Pallas TPU implementation of KLDivergenceLoss.forward for (N, C) inputs."""
    n, c = outputs.shape
    int_targets = jnp.issubdtype(targets.dtype, jnp.integer)

    tile_budget, vmem_limit = _vmem_plan()

    if int_targets:
        stream_itemsizes = (outputs.dtype.itemsize,)
        f32_live = 4
    else:
        stream_itemsizes = (outputs.dtype.itemsize, targets.dtype.itemsize)
        f32_live = 6

    n_buffers = 2
    if tile_rows is not None:
        tn = tile_rows
    else:
        tn = _pick_tile_rows(n, c, stream_itemsizes, f32_live, tile_budget, n_buffers)
        # Large-C case where the VMEM budget forces small tiles (mainly v7x's
        # 64 MiB): deepen the input pipeline so DMA stays ahead of compute.
        if tn < 256 and c >= 1024:
            n_buffers = 3
            tn = _pick_tile_rows(n, c, stream_itemsizes, f32_live, tile_budget, n_buffers)
    tn = min(tn, n)

    total_blocks = pl.cdiv(n, tn)
    # 2-way split over the leading "parallel" grid axis: on v7x the two
    # TensorCores each take half the row blocks; on single-TC chips the outer
    # axis just runs serially (at most one clamped duplicate block of overhead).
    num_cores = 2 if total_blocks >= 2 else 1
    blocks_per_core = pl.cdiv(total_blocks, num_cores)
    last_block = total_blocks - 1

    def in_row_map(ci, si):
        # Clamp overflow blocks of the uneven core split so the DMA is always
        # in bounds; the kernel masks their contribution to zero.
        return (jnp.minimum(ci * blocks_per_core + si, last_block), 0)

    spec_kwargs = {}
    if n_buffers == 3:
        spec_kwargs = dict(pipeline_mode=pl.Buffered(3))

    x_spec = pl.BlockSpec((tn, c), in_row_map, **spec_kwargs)

    if int_targets:
        tgt_arr = targets.reshape(n, 1).astype(jnp.int32)
        t_spec = pl.BlockSpec((tn, 1), in_row_map)
        e = math.e
        denom = e + (c - 1)
        q_hot, q_oth = e / denom, 1.0 / denom
        neg_entropy = q_hot * math.log(q_hot) + (c - 1) * q_oth * math.log(q_oth)
        kernel = functools.partial(
            _kl_int_kernel, tile_rows=tn, n_total=n, blocks_per_core=blocks_per_core,
            q_hot=q_hot, q_oth=q_oth, neg_entropy=neg_entropy, num_classes=float(c))
        bytes_accessed = n * c * outputs.dtype.itemsize + n * 4
        transcendentals = n * c
    else:
        tgt_arr = targets
        t_spec = pl.BlockSpec((tn, c), in_row_map, **spec_kwargs)
        kernel = functools.partial(
            _kl_float_kernel, tile_rows=tn, n_total=n, blocks_per_core=blocks_per_core)
        bytes_accessed = n * c * (outputs.dtype.itemsize + targets.dtype.itemsize)
        transcendentals = 2 * n * c

    partials = pl.pallas_call(
        kernel,
        out_shape=jax.ShapeDtypeStruct((num_cores * 8, 128), jnp.float32),
        grid_spec=pltpu.PrefetchScalarGridSpec(
            num_scalar_prefetch=0,
            grid=(num_cores, blocks_per_core),
            in_specs=[x_spec, t_spec],
            out_specs=pl.BlockSpec((8, 128), lambda ci, si: (ci, 0)),
        ),
        compiler_params=pltpu.CompilerParams(
            dimension_semantics=("parallel", "arbitrary"),
            vmem_limit_bytes=vmem_limit,
        ),
        cost_estimate=pl.CostEstimate(
            flops=8 * n * c,
            transcendentals=transcendentals,
            bytes_accessed=bytes_accessed + num_cores * 8 * 128 * 4,
        ),
    )(outputs, tgt_arr)

    # Each core's (8, 128) block holds its partial sum broadcast to every
    # element; pick one representative per core, sum, and apply 'batchmean'.
    return jnp.sum(partials[::8, 0]) / n


if __name__ == "__main__":
    key = jax.random.PRNGKey(0)
    k1, k2, k3, k4, k5, k6 = jax.random.split(key, 6)

    def ref(o, t):
        if jnp.issubdtype(t.dtype, jnp.integer):
            t = jax.nn.one_hot(t, num_classes=o.shape[1], dtype=jnp.float32)
        o = o.astype(jnp.float32)
        t = t.astype(jnp.float32)
        log_p = jax.nn.log_softmax(o, axis=1)
        q = jax.nn.softmax(t, axis=1)
        pw = jnp.where(q > 0, q * (jnp.log(jnp.where(q > 0, q, 1.0)) - log_p), 0.0)
        return jnp.sum(pw) / o.shape[0]

    # Exact per-row divide in the kernel -> tight tolerance catches structural
    # bugs (wrong reductions / divisor / masking are orders of magnitude off).
    TOL = dict(rtol=1e-4, atol=1e-5)

    N, C = 8, 128
    outputs = jax.random.normal(k1, (N, C), dtype=jnp.float32)
    targets_float = jax.random.normal(k2, (N, C), dtype=jnp.float32)
    targets_int = jax.random.randint(k3, (N,), 0, C, dtype=jnp.int32)

    # Float-target path.
    loss_f = kl_divergence_loss(outputs, targets_float)
    jax.block_until_ready(loss_f)
    assert jnp.allclose(loss_f, ref(outputs, targets_float), **TOL)

    # Integer-target path (closed-form softmax(one_hot), no (N, C) target stream).
    loss_i = kl_divergence_loss(outputs, targets_int)
    jax.block_until_ready(loss_i)
    assert jnp.allclose(loss_i, ref(outputs, targets_int), **TOL)

    # bf16 storage (math stays f32 inside the kernel).
    loss_b = kl_divergence_loss(outputs.astype(jnp.bfloat16),
                                targets_float.astype(jnp.bfloat16))
    jax.block_until_ready(loss_b)
    assert jnp.allclose(
        loss_b,
        ref(outputs.astype(jnp.bfloat16), targets_float.astype(jnp.bfloat16)),
        **TOL)

    # Multi-tile / multi-core path with a partial last tile and a clamped
    # overflow block: N=20, tile=8 -> 3 real row blocks split 2+2 across the
    # "parallel" core axis (the 4th block is clamped and fully masked).
    N2 = 20
    outputs2 = jax.random.normal(k4, (N2, C), dtype=jnp.float32)
    targets2 = jax.random.normal(k5, (N2, C), dtype=jnp.float32)
    loss_t = kl_divergence_loss(outputs2, targets2, tile_rows=8)
    jax.block_until_ready(loss_t)
    assert jnp.allclose(loss_t, ref(outputs2, targets2), **TOL)

    # Same multi-tile / multi-core exercise for the integer-label closed form.
    targets2_int = jax.random.randint(k6, (N2,), 0, C, dtype=jnp.int32)
    loss_ti = kl_divergence_loss(outputs2, targets2_int, tile_rows=8)
    jax.block_until_ready(loss_ti)
    assert jnp.allclose(loss_ti, ref(outputs2, targets2_int), **TOL)

    print("KERNEL_OK")
</pallas_src>

<mosaic_0001>
module attributes {stable_mosaic.version = 11 : i64} {
  func.func @_kl_float_kernel(%arg0: i32, %arg1: i32, %arg2: memref<8x128xf32, #tpu.memory_space<vmem>>, %arg3: memref<8x128xf32, #tpu.memory_space<vmem>>, %arg4: memref<8x128xf32, #tpu.memory_space<vmem>>) attributes {dimension_semantics = [#tpu.dimension_semantics<parallel>, #tpu.dimension_semantics<arbitrary>], iteration_bounds = array<i64: 1, 1>, scalar_prefetch = 0 : i64, scratch_operands = 0 : i64, tpu.core_type = #tpu.core_type<tc>, window_params = [{transform_indices = @transform_0, window_bounds = array<i64: 8, 128>}, {transform_indices = @transform_1, window_bounds = array<i64: 8, 128>}, {transform_indices = @transform_2, window_bounds = array<i64: 8, 128>}]} {
    %c1_i32 = arith.constant 1 : i32
    %0 = arith.muli %arg0, %c1_i32 : i32
    %1 = arith.addi %0, %arg1 : i32
    %c8_i32 = arith.constant 8 : i32
    %2 = arith.muli %1, %c8_i32 : i32
    %c0_i32 = arith.constant 0 : i32
    %3 = arith.cmpi eq, %arg1, %c0_i32 : i32
    %4 = arith.extui %3 : i1 to i32
    %c0_i32_0 = arith.constant 0 : i32
    %5 = arith.cmpi ne, %4, %c0_i32_0 : i32
    scf.if %5 {
      %cst_14 = arith.constant 0.000000e+00 : f32
      %43 = vector.broadcast %cst_14 : f32 to vector<8x128xf32>
      %c0_15 = arith.constant 0 : index
      %c0_16 = arith.constant 0 : index
      %44 = vector.load %arg4[%c0_15, %c0_16] : memref<8x128xf32, #tpu.memory_space<vmem>>, vector<8x128xf32>
      tpu.vector_store %arg4[%c0_15, %c0_16], %43 {strides = array<i32>} : memref<8x128xf32, #tpu.memory_space<vmem>>, vector<8x128xf32>,
    } else {
    }
    %c0 = arith.constant 0 : index
    %c0_1 = arith.constant 0 : index
    %6 = vector.load %arg2[%c0, %c0_1] : memref<8x128xf32, #tpu.memory_space<vmem>>, vector<8x128xf32>
    %c0_2 = arith.constant 0 : index
    %c0_3 = arith.constant 0 : index
    %7 = vector.load %arg3[%c0_2, %c0_3] : memref<8x128xf32, #tpu.memory_space<vmem>>, vector<8x128xf32>
    %cst = arith.constant dense<0xFF800000> : vector<8xf32>
    %8 = vector.multi_reduction <maximumf>, %6, %cst [1] : vector<8x128xf32> to vector<8xf32>
    %9 = vector.shape_cast %8 : vector<8xf32> to vector<8x1xf32>
    %10 = vector.broadcast %9 : vector<8x1xf32> to vector<8x128xf32>
    %11 = arith.subf %6, %10 : vector<8x128xf32>
    %cst_4 = arith.constant dense<0xFF800000> : vector<8xf32>
    %12 = vector.multi_reduction <maximumf>, %7, %cst_4 [1] : vector<8x128xf32> to vector<8xf32>
    %13 = vector.shape_cast %12 : vector<8xf32> to vector<8x1xf32>
    %14 = vector.broadcast %13 : vector<8x1xf32> to vector<8x128xf32>
    %15 = arith.subf %7, %14 : vector<8x128xf32>
    %16 = math.exp %11 : vector<8x128xf32>
    %cst_5 = arith.constant dense<0.000000e+00> : vector<8xf32>
    %17 = vector.multi_reduction <add>, %16, %cst_5 [1] : vector<8x128xf32> to vector<8xf32>
    %18 = vector.shape_cast %17 : vector<8xf32> to vector<8x1xf32>
    %19 = math.exp %15 : vector<8x128xf32>
    %cst_6 = arith.constant dense<0.000000e+00> : vector<8xf32>
    %20 = vector.multi_reduction <add>, %19, %cst_6 [1] : vector<8x128xf32> to vector<8xf32>
    %21 = vector.shape_cast %20 : vector<8xf32> to vector<8x1xf32>
    %22 = arith.subf %15, %11 : vector<8x128xf32>
    %23 = math.log %18 : vector<8x1xf32>
    %24 = math.log %21 : vector<8x1xf32>
    %25 = arith.subf %23, %24 : vector<8x1xf32>
    %26 = vector.broadcast %25 : vector<8x1xf32> to vector<8x128xf32>
    %27 = arith.addf %22, %26 : vector<8x128xf32>
    %cst_7 = arith.constant 0.000000e+00 : f32
    %28 = vector.broadcast %cst_7 : f32 to vector<8x128xf32>
    %29 = arith.cmpf ogt, %19, %28 : vector<8x128xf32>
    %30 = arith.mulf %19, %27 : vector<8x128xf32>
    %cst_8 = arith.constant 0.000000e+00 : f32
    %31 = vector.broadcast %cst_8 : f32 to vector<8x128xf32>
    %32 = arith.select %29, %30, %31 : vector<8x128xi1>, vector<8x128xf32>
    %cst_9 = arith.constant dense<0.000000e+00> : vector<8xf32>
    %33 = vector.multi_reduction <add>, %32, %cst_9 [1] : vector<8x128xf32> to vector<8xf32>
    %34 = vector.shape_cast %33 : vector<8xf32> to vector<8x1xf32>
    %35 = arith.divf %34, %21 : vector<8x1xf32>
    %c8_i32_10 = arith.constant 8 : i32
    %36 = arith.addi %2, %c8_i32_10 : i32
    %c8_i32_11 = arith.constant 8 : i32
    %37 = arith.cmpi sle, %36, %c8_i32_11 : i32
    %38 = arith.extui %37 : i1 to i32
    %c0_i32_12 = arith.constant 0 : i32
    %39 = arith.cmpi ne, %38, %c0_i32_12 : i32
    scf.if %39 {
      %c0_14 = arith.constant 0 : index
      %c0_15 = arith.constant 0 : index
      %43 = vector.load %arg4[%c0_14, %c0_15] : memref<8x128xf32, #tpu.memory_space<vmem>>, vector<8x128xf32>
      %44 = vector.shape_cast %35 : vector<8x1xf32> to vector<1x8x1xf32>
      %cst_16 = arith.constant dense<0.000000e+00> : vector<1xf32>
      %45 = vector.multi_reduction <add>, %44, %cst_16 [1, 2] : vector<1x8x1xf32> to vector<1xf32>
      %46 = vector.shape_cast %45 : vector<1xf32> to vector<1x1x1xf32>
      %47 = vector.extract %46[0, 0, 0] : f32 from vector<1x1x1xf32>
      %48 = vector.broadcast %47 : f32 to vector<8x128xf32>
      %49 = arith.addf %43, %48 : vector<8x128xf32>
      %c0_17 = arith.constant 0 : index
      %c0_18 = arith.constant 0 : index
      %50 = vector.load %arg4[%c0_17, %c0_18] : memref<8x128xf32, #tpu.memory_space<vmem>>, vector<8x128xf32>
      tpu.vector_store %arg4[%c0_17, %c0_18], %49 {strides = array<i32>} : memref<8x128xf32, #tpu.memory_space<vmem>>, vector<8x128xf32>,
    } else {
    }
    %true = arith.constant true
    %40 = arith.xori %37, %true : i1
    %41 = arith.extui %40 : i1 to i32
    %c0_i32_13 = arith.constant 0 : i32
    %42 = arith.cmpi ne, %41, %c0_i32_13 : i32
    scf.if %42 {
      %43 = tpu.iota {dimensions = array<i32: 0>} : vector<8x1xi32>
      %44 = vector.broadcast %2 : i32 to vector<8x1xi32>
      %45 = arith.addi %43, %44 : vector<8x1xi32>
      %c0_14 = arith.constant 0 : index
      %c0_15 = arith.constant 0 : index
      %46 = vector.load %arg4[%c0_14, %c0_15] : memref<8x128xf32, #tpu.memory_space<vmem>>, vector<8x128xf32>
      %c8_i32_16 = arith.constant 8 : i32
      %47 = vector.broadcast %c8_i32_16 : i32 to vector<8x1xi32>
      %48 = arith.cmpi slt, %45, %47 : vector<8x1xi32>
      %cst_17 = arith.constant 0.000000e+00 : f32
      %49 = vector.broadcast %cst_17 : f32 to vector<8x1xf32>
      %50 = arith.select %48, %35, %49 : vector<8x1xi1>, vector<8x1xf32>
      %51 = vector.shape_cast %50 : vector<8x1xf32> to vector<1x8x1xf32>
      %cst_18 = arith.constant dense<0.000000e+00> : vector<1xf32>
      %52 = vector.multi_reduction <add>, %51, %cst_18 [1, 2] : vector<1x8x1xf32> to vector<1xf32>
      %53 = vector.shape_cast %52 : vector<1xf32> to vector<1x1x1xf32>
      %54 = vector.extract %53[0, 0, 0] : f32 from vector<1x1x1xf32>
      %55 = vector.broadcast %54 : f32 to vector<8x128xf32>
      %56 = arith.addf %46, %55 : vector<8x128xf32>
      %c0_19 = arith.constant 0 : index
      %c0_20 = arith.constant 0 : index
      %57 = vector.load %arg4[%c0_19, %c0_20] : memref<8x128xf32, #tpu.memory_space<vmem>>, vector<8x128xf32>
      tpu.vector_store %arg4[%c0_19, %c0_20], %56 {strides = array<i32>} : memref<8x128xf32, #tpu.memory_space<vmem>>, vector<8x128xf32>,
    } else {
    }
    return
  }
  func.func @transform_0(%arg0: i32, %arg1: i32) -> (i32, i32) {
    %c1_i32 = arith.constant 1 : i32
    %0 = arith.muli %arg0, %c1_i32 : i32
    %1 = arith.addi %0, %arg1 : i32
    %c0_i32 = arith.constant 0 : i32
    %2 = arith.minsi %1, %c0_i32 : i32
    %c0_i32_0 = arith.constant 0 : i32
    %c0_i32_1 = arith.constant 0 : i32
    return %2, %c0_i32_0 : i32, i32
  }
  func.func @transform_1(%arg0: i32, %arg1: i32) -> (i32, i32) {
    %c1_i32 = arith.constant 1 : i32
    %0 = arith.muli %arg0, %c1_i32 : i32
    %1 = arith.addi %0, %arg1 : i32
    %c0_i32 = arith.constant 0 : i32
    %2 = arith.minsi %1, %c0_i32 : i32
    %c0_i32_0 = arith.constant 0 : i32
    %c0_i32_1 = arith.constant 0 : i32
    return %2, %c0_i32_0 : i32, i32
  }
  func.func @transform_2(%arg0: i32, %arg1: i32) -> (i32, i32) {
    %c0_i32 = arith.constant 0 : i32
    %c0_i32_0 = arith.constant 0 : i32
    return %arg0, %c0_i32 : i32, i32
  }
}

</mosaic_0001>

<llo_original>
// kernel: tpu_custom_call.1
$region0: #{tpu_custom_call.1}
  #allocation0 [shape = 'u32[]', space=smem, size = 0x4, offset = 0x4, fixed_abs, tag = 'smem constant byte address 0x4 - core index']
  #allocation1 [shape = 'u32[144,128]{1,0:T(1,128)}', space=vmem, size = 0x12000, scoped, tag = 'internal scratch']
  %s0 = inlined_call_operand.hbm [shape: f32[8,128], index: 0, kind: input, shape index: {}]
  %s1 = inlined_call_operand.hbm [shape: f32[8,128], index: 1, kind: input, shape index: {}]
  %s2 = inlined_call_operand.hbm [shape: f32[8,128], index: 2, kind: output, shape index: {}]
  %s3 = sld [smem:[#allocation0]]
  $region38: #{tpu_custom_call.1} parent=0
    _
  %s5 = ssub.s32 1, %s3
  %s6 = scalar_select 0, %s5, %s3
  $region1: #{tpu_custom_call.1} parent=0
    #allocation2 [shape = 'u8[4096]{0}', space=vmem, size = 0x1000, scoped, tag = 'input window, operand 0, single buffered']
    #allocation3 [shape = 's32[1]{0}', space=sflag, size = 0x4, scoped, tag = 'scoped memory for tpu_custom_call.1']
    #allocation4 [shape = 's32[1]{0}', space=sflag, size = 0x4, scoped, tag = 'scoped memory for tpu_custom_call.1']
    #allocation5 [shape = 'u8[4096]{0}', space=vmem, size = 0x1000, scoped, tag = 'input window, operand 1, single buffered']
    #allocation6 [shape = 's32[1]{0}', space=sflag, size = 0x4, scoped, tag = 'scoped memory for tpu_custom_call.1']
    #allocation7 [shape = 'u8[4096]{0}', space=vmem, size = 0x1000, scoped, tag = 'output window, operand 0, single buffered']
    %7 = vsyncpa [#allocation3], 0
    %8 = vsyncpa [#allocation6], 0
    %9 = vsyncpa [#allocation4], 0
    // Predicated region
    $region2: #{tpu_custom_call.1} parent=1 // pred_check
      _
    $region3: #{tpu_custom_call.1} parent=1 // pred_check_branch
      %11 = sbr.rel (0) target = $region5
    $region4: #{tpu_custom_call.1} parent=1 // pred_region
      %s12 = sadd.s32 0, 0
      %p13 = scmp.lt.s32.totalorder %s12, 0
      %s14 = scalar_select %p13, %s12, 0
      %s16 = ssub.s32 128, 128
      %17 = vsyncadd [#allocation3], %s16
      %s18 = smul.addr %s14, 128
      %s19 = scalar_lea.hbm %s0, %s18
      %s21 = sshll.u32 [#allocation2], 4
      %s22 = int_to_ptr.vmem [resolvable:$true] %s21
      %24 = dma.hbm_to_vmem [thread:$0]  %s19, 128, %s22, [#allocation3]
    $region5: #{tpu_custom_call.1} parent=1 // pred_fallthru
      _
    // Predicated region
    $region6: #{tpu_custom_call.1} parent=1 // pred_check
      _
    $region7: #{tpu_custom_call.1} parent=1 // pred_check_branch
      %26 = sbr.rel (0) target = $region9
    $region8: #{tpu_custom_call.1} parent=1 // pred_region
      %s27 = sadd.s32 0, 0
      %p28 = scmp.lt.s32.totalorder %s27, 0
      %s29 = scalar_select %p28, %s27, 0
      %s31 = ssub.s32 128, 128
      %32 = vsyncadd [#allocation6], %s31
      %s33 = smul.addr %s29, 128
      %s34 = scalar_lea.hbm %s1, %s33
      %s36 = sshll.u32 [#allocation5], 4
      %s37 = int_to_ptr.vmem [resolvable:$true] %s36
      %39 = dma.hbm_to_vmem [thread:$0]  %s34, 128, %s37, [#allocation6]
    $region9: #{tpu_custom_call.1} parent=1 // pred_fallthru
      _
    // Predicated region
    $region10: #{tpu_custom_call.1} parent=1 // pred_check
      _
    $region11: #{tpu_custom_call.1} parent=1 // pred_check_branch
      %41 = sbr.rel (0) target = $region13
    $region12: #{tpu_custom_call.1} parent=1 // pred_region
      %42 = dma.done [#allocation3], 128
    $region13: #{tpu_custom_call.1} parent=1 // pred_fallthru
      _
    // Predicated region
    $region14: #{tpu_custom_call.1} parent=1 // pred_check
      _
    $region15: #{tpu_custom_call.1} parent=1 // pred_check_branch
      %44 = sbr.rel (0) target = $region17
    $region16: #{tpu_custom_call.1} parent=1 // pred_region
      %45 = dma.done [#allocation6], 128
    $region17: #{tpu_custom_call.1} parent=1 // pred_fallthru
      _
    %s46 = sadd.s32 0, 0
    %p47 = scmp.lt.s32.totalorder %s46, 0
    %s48 = scalar_select %p47, %s46, 0
    %s49 = sadd.s32 0, 0
    %p50 = scmp.lt.s32.totalorder %s49, 0
    %s51 = scalar_select %p50, %s49, 0
    %s52 = sadd.s32 0, 0
    %s53 = smul.u32 %s52, 8
    %p54 = scmp.eq.s32.totalorder 0, 0
    // Predicated region
    $region18: #{tpu_custom_call.1} parent=1 // pred_check
      %p55 = pneg %p54
    $region19: #{tpu_custom_call.1} parent=1 // pred_check_branch
      %57 = sbr.rel (%p55) target = $region21
    $region20: #{tpu_custom_call.1} parent=1 // pred_region
      %58 = vst [vmem:[#allocation7] sm:$0xff] 0.0
    $region21: #{tpu_custom_call.1} parent=1 // pred_fallthru
      _
    %v59 = vld [vmem:[#allocation2] sm:$0xff]
    %v60 = vld [vmem:[#allocation5] sm:$0xff]
    %61 = vmax.xlane.f32.xlu0 %v59
    %v62 = vpop.xlane.xlu0 %61
    %v63 = vsub.f32 %v59, %v62
    %64 = vmax.xlane.f32.xlu0 %v60
    %v65 = vpop.xlane.xlu0 %64
    %v66 = vsub.f32 %v60, %v65
    %v67 = vmul.f32 %v63, 1.442695
    %v68 = vpow.pop %v67
    %69 = vadd.xlane.f32.xlu0 %v68
    %v70 = vpop.xlane.xlu0 %69
    %v71 = vmul.f32 %v66, 1.442695
    %v72 = vpow.pop %v71
    %73 = vadd.xlane.f32.xlu0 %v72
    %v74 = vpop.xlane.xlu0 %73
    %v75 = vsub.f32 %v66, %v63
    %v76 = vlog2.pop %v70
    %v77 = vmul.f32 %v76, 0.6931472
    %v78 = vlog2.pop %v74
    %v79 = vmul.f32 %v78, 0.6931472
    %v80 = vsub.f32 %v77, %v79
    %v81 = vadd.f32 %v75, %v80
    %vm82 = vcmp.gt.f32.partialorder %v72, 0.0
    %v83 = vmul.f32 %v72, %v81
    %v84 = vsel %vm82, %v83, 0.0
    %85 = vadd.xlane.f32.xlu0 %v84
    %v86 = vpop.xlane.xlu0 %85
    %v87 = vrcp.pop %v74
    %v88 = vmul.f32 %v86, %v87
    %s89 = sadd.s32 %s53, 8
    %p90 = scmp.le.s32.totalorder %s89, 8
    // Predicated region
    $region22: #{tpu_custom_call.1} parent=1 // pred_check
      %p91 = pneg %p90
    $region23: #{tpu_custom_call.1} parent=1 // pred_check_branch
      %93 = sbr.rel (%p91) target = $region25
    $region24: #{tpu_custom_call.1} parent=1 // pred_region
      %v94 = vld [vmem:[#allocation7] sm:$0xff]
      %vm95 = vcmask 7168
      %v96 = vsel %vm95, %v88, 0.0
      %97 = vadd.xlane.f32.xlu0 %v96
      %v98 = vpop.xlane.xlu0 %97
      %v99 = vrot.slane %v98, 4
      %v100 = vadd.f32 %v98, %v99
      %v101 = vrot.slane %v100, 2
      %v102 = vadd.f32 %v100, %v101
      %v103 = vrot.slane %v102, 1
      %v104 = vadd.f32 %v102, %v103
      %s105 = vtos %v104
      %v106 = vstv %s105
      %v107 = vadd.f32 %v94, %v106
      %108 = vst [vmem:[#allocation7] sm:$0xff] %v107
    $region25: #{tpu_custom_call.1} parent=1 // pred_fallthru
      _
    %p109 = scmp.gt.s32.totalorder %s89, 8
    // Predicated region
    $region26: #{tpu_custom_call.1} parent=1 // pred_check
      %p110 = pneg %p109
    $region27: #{tpu_custom_call.1} parent=1 // pred_check_branch
      %112 = sbr.rel (%p110) target = $region29
    $region28: #{tpu_custom_call.1} parent=1 // pred_region
      %v113 = vlaneseq
      %v114 = vshrl.u32 %v113, 7
      %v115 = vstv %s53
      %v116 = vadd.s32 %v114, %v115
      %v117 = vld [vmem:[#allocation7] sm:$0xff]
      %vm118 = vcmp.lt.s32.totalorder %v116, 8
      %v119 = vsel %vm118, %v88, 0.0
      %vm120 = vcmask 7168
      %v121 = vsel %vm120, %v119, 0.0
      %122 = vadd.xlane.f32.xlu0 %v121
      %v123 = vpop.xlane.xlu0 %122
      %v124 = vrot.slane %v123, 4
      %v125 = vadd.f32 %v123, %v124
      %v126 = vrot.slane %v125, 2
      %v127 = vadd.f32 %v125, %v126
      %v128 = vrot.slane %v127, 1
      %v129 = vadd.f32 %v127, %v128
      %s130 = vtos %v129
      %v131 = vstv %s130
      %v132 = vadd.f32 %v117, %v131
      %133 = vst [vmem:[#allocation7] sm:$0xff] %v132
    $region29: #{tpu_custom_call.1} parent=1 // pred_fallthru
      _
    // Predicated region
    $region30: #{tpu_custom_call.1} parent=1 // pred_check
      _
    $region31: #{tpu_custom_call.1} parent=1 // pred_check_branch
      %135 = sbr.rel (0) target = $region33
    $region32: #{tpu_custom_call.1} parent=1 // pred_region
      %s137 = ssub.s32 128, 128
      %138 = vsyncadd [#allocation4], %s137
      %s140 = sshll.u32 [#allocation7], 4
      %s141 = int_to_ptr.vmem [resolvable:$true] %s140
      %143 = dma.vmem_to_hbm [thread:$0]  %s141, 128, %s2, [#allocation4]
    $region33: #{tpu_custom_call.1} parent=1 // pred_fallthru
      _
    // Predicated region
    $region34: #{tpu_custom_call.1} parent=1 // pred_check
      _
    $region35: #{tpu_custom_call.1} parent=1 // pred_check_branch
      %145 = sbr.rel (0) target = $region37
    $region36: #{tpu_custom_call.1} parent=1 // pred_region
      %146 = dma.done [#allocation4], 128
    $region37: #{tpu_custom_call.1} parent=1 // pred_fallthru
      _
    %147 = vsyncpa [#allocation3], 1
    %148 = vsyncpa [#allocation6], 1
    %149 = vsyncpa [#allocation4], 1

</llo_original>
